<compile_context>
chip_gen: v7x
topology: tpu7x:2x2x1
jax: 0.10.0
libtpu: 0.0.40
codegen_flags: <defaults>
</compile_context>

<pallas_src>
import functools

import jax
import jax.numpy as jnp
from jax.experimental import pallas as pl
from jax.experimental.pallas import tpu as pltpu

_LANE = 128       # feature dims padded to multiples of this (lane-dense stores)
_ROW_ALIGN = 16   # batch-tile multiple (bf16 packs 16 sublanes per vreg)
_MAX_TB = 2048    # max rows per grid step (~2 MiB/step VMEM double-buffered)


def _round_up(n, m):
    return ((n + m - 1) // m) * m


def _pick_batch_tile(batch):
    """Rows per grid step: as large as possible (<= _MAX_TB), a multiple of 16,
    and ~ceil(batch/2) once the batch is nontrivial so the 'parallel' batch
    axis has >= 2 grid steps (lets v7x shard across its two TensorCores)."""
    if batch <= _ROW_ALIGN:
        return _ROW_ALIGN
    half = _round_up(-(-batch // 2), _ROW_ALIGN)
    return min(_MAX_TB, half)


def _qnet_kernel(x_ref, w1_ref, b1_ref, w2_ref, b2_ref, out_ref):
    """Fused forward: out = relu(x @ W1 + b1) @ W2 + b2 (bf16 MXU, f32 accum)."""
    # Layer 1: bf16 matmul on MXU, f32 accumulation, bias broadcast over batch.
    h = jnp.dot(x_ref[...], w1_ref[...], preferred_element_type=jnp.float32)
    h = jnp.maximum(h + b1_ref[...], 0.0)                    # (TB, Hp) ReLU on VPU
    # Layer 2: cast activations back to bf16 for the MXU, accumulate in f32.
    o = jnp.dot(h.astype(jnp.bfloat16), w2_ref[...],
                preferred_element_type=jnp.float32)
    out_ref[...] = (o + b2_ref[...]).astype(out_ref.dtype)   # lane-dense bf16 store


def prepare_params(w1, b1, w2, b2):
    """One-time parameter prep (call once; keep results out of the hot path).

    w1: (D_in, H), b1: (H,) or (1, H), w2: (H, D_out), b2: (D_out,) or (1, D_out).
    Pads H and D_out up to multiples of 128, casts weights to bf16 (biases stay
    f32, 2-D lane-dense), returns (w1p, b1p, w2p, b2p) for linear_qnet_forward.
    """
    d_in, hidden = w1.shape
    d_out = w2.shape[1]
    h_p = _round_up(hidden, _LANE)
    d_out_p = _round_up(d_out, _LANE)

    w1p = jnp.zeros((d_in, h_p), jnp.bfloat16).at[:, :hidden].set(
        w1.astype(jnp.bfloat16))
    b1p = jnp.zeros((1, h_p), jnp.float32).at[:, :hidden].set(
        jnp.reshape(b1, (1, hidden)).astype(jnp.float32))
    w2p = jnp.zeros((h_p, d_out_p), jnp.bfloat16).at[:hidden, :d_out].set(
        w2.astype(jnp.bfloat16))
    b2p = jnp.zeros((1, d_out_p), jnp.float32).at[:, :d_out].set(
        jnp.reshape(b2, (1, d_out)).astype(jnp.float32))
    return w1p, b1p, w2p, b2p


@functools.partial(jax.jit, static_argnames=("d_out",))
def linear_qnet_forward(x, w1p, b1p, w2p, b2p, *, d_out):
    """x: (B, D_in) f32; (w1p, b1p, w2p, b2p) from prepare_params().
    Returns (B, d_out) f32."""
    batch, d_in = x.shape
    h_p = w1p.shape[1]
    d_out_p = w2p.shape[1]

    tb = _pick_batch_tile(batch)
    batch_p = _round_up(batch, tb)

    # Only the activation stream is touched per call: cast to bf16 and pad the
    # batch dim.  The feature dim stays at its true width (no 128-wide padding).
    if batch_p == batch:
        xp = x.astype(jnp.bfloat16)
    else:
        xp = jnp.zeros((batch_p, d_in), jnp.bfloat16).at[:batch, :].set(
            x.astype(jnp.bfloat16))

    flops = 2 * batch_p * (d_in * h_p + h_p * d_out_p)
    bytes_accessed = (batch_p * d_in * 2                      # x (bf16)
                      + (d_in * h_p + h_p * d_out_p) * 2      # weights (bf16)
                      + (h_p + d_out_p) * 4                   # biases (f32)
                      + batch_p * d_out_p * 2)                # out (bf16)

    out_p = pl.pallas_call(
        _qnet_kernel,
        out_shape=jax.ShapeDtypeStruct((batch_p, d_out_p), jnp.bfloat16),
        grid_spec=pltpu.PrefetchScalarGridSpec(
            num_scalar_prefetch=0,
            grid=(batch_p // tb,),
            in_specs=[
                pl.BlockSpec((tb, d_in), lambda i: (i, 0)),      # x tile (true width)
                pl.BlockSpec((d_in, h_p), lambda i: (0, 0)),     # W1 resident
                pl.BlockSpec((1, h_p), lambda i: (0, 0)),        # b1 resident
                pl.BlockSpec((h_p, d_out_p), lambda i: (0, 0)),  # W2 resident
                pl.BlockSpec((1, d_out_p), lambda i: (0, 0)),    # b2 resident
            ],
            out_specs=pl.BlockSpec((tb, d_out_p), lambda i: (i, 0)),
        ),
        compiler_params=pltpu.CompilerParams(
            dimension_semantics=("parallel",)),
        cost_estimate=pl.CostEstimate(
            flops=flops, transcendentals=0, bytes_accessed=bytes_accessed),
    )(xp, w1p, b1p, w2p, b2p)

    # Strip padding (garbage rows from zero-padded batch are dropped here) and
    # return f32 to match the nn.Module API.  Tiny slice -> negligible cost.
    return out_p[:batch, :d_out].astype(jnp.float32)


def init_params(key, input_size, hidden_size, output_size):
    """Deterministic init mimicking nn.Linear's U(-1/sqrt(fan_in), 1/sqrt(fan_in))."""
    k1, k2, k3, k4 = jax.random.split(key, 4)
    bound1 = 1.0 / jnp.sqrt(input_size)
    bound2 = 1.0 / jnp.sqrt(hidden_size)
    w1 = jax.random.uniform(k1, (input_size, hidden_size), jnp.float32, -bound1, bound1)
    b1 = jax.random.uniform(k2, (hidden_size,), jnp.float32, -bound1, bound1)
    w2 = jax.random.uniform(k3, (hidden_size, output_size), jnp.float32, -bound2, bound2)
    b2 = jax.random.uniform(k4, (output_size,), jnp.float32, -bound2, bound2)
    return w1, b1, w2, b2


def _reference_kernel_numerics(x, w1, b1, w2, b2):
    """Pure-JAX reference emulating the kernel numerics (bf16 MXU inputs,
    f32 accumulation, bf16 output)."""
    xb = x.astype(jnp.bfloat16).astype(jnp.float32)
    w1b = w1.astype(jnp.bfloat16).astype(jnp.float32)
    w2b = w2.astype(jnp.bfloat16).astype(jnp.float32)
    h = jnp.maximum(xb @ w1b + jnp.reshape(b1, (1, -1)), 0.0)
    o = h.astype(jnp.bfloat16).astype(jnp.float32) @ w2b + jnp.reshape(b2, (1, -1))
    return o.astype(jnp.bfloat16).astype(jnp.float32)


def _reference_f32(x, w1, b1, w2, b2):
    h = jnp.maximum(x @ w1 + jnp.reshape(b1, (1, -1)), 0.0)
    return h @ w2 + jnp.reshape(b2, (1, -1))


# TODO(synk): Linear_QNet.save (torch.save checkpointing) is host-side I/O with no
# Pallas equivalent; only the forward pass is implemented here.

if __name__ == "__main__":
    # Small shapes consistent with Linear_QNet(input_size, hidden_size, output_size)
    batch, input_size, hidden_size, output_size = 2, 16, 32, 4

    key = jax.random.PRNGKey(0)
    kx, kp, kx2 = jax.random.split(key, 3)
    x = jax.random.normal(kx, (batch, input_size), dtype=jnp.float32)
    w1, b1, w2, b2 = init_params(kp, input_size, hidden_size, output_size)

    # One-time parameter prep: padding + bf16 cast hoisted off the per-call path.
    params = prepare_params(w1, b1, w2, b2)

    out = jax.block_until_ready(
        linear_qnet_forward(x, *params, d_out=output_size))
    assert out.shape == (batch, output_size)

    # Tight check against a reference that emulates the kernel numerics.
    ref = _reference_kernel_numerics(x, w1, b1, w2, b2)
    assert jnp.allclose(out, ref, atol=1e-2, rtol=1e-2), (
        float(jnp.max(jnp.abs(out - ref))))
    # Loose check against full-f32 math (bf16 MXU inputs/output cost ~1e-2 abs).
    ref_f32 = _reference_f32(x, w1, b1, w2, b2)
    assert jnp.allclose(out, ref_f32, atol=5e-2, rtol=5e-2)

    # Exercise the multi-grid-step path (2 steps of 2048 rows -> both v7x TCs).
    big_batch = 4096
    xb = jax.random.normal(kx2, (big_batch, input_size), dtype=jnp.float32)
    out_big = jax.block_until_ready(
        linear_qnet_forward(xb, *params, d_out=output_size))
    assert out_big.shape == (big_batch, output_size)
    assert jnp.allclose(out_big, _reference_kernel_numerics(xb, w1, b1, w2, b2),
                        atol=1e-2, rtol=1e-2)

    print("KERNEL_OK")
</pallas_src>

<mosaic_0001>
module attributes {stable_mosaic.version = 11 : i64} {
  func.func @_qnet_kernel(%arg0: i32, %arg1: memref<16x16xbf16, #tpu.memory_space<vmem>>, %arg2: memref<16x128xbf16, #tpu.memory_space<vmem>>, %arg3: memref<1x128xf32, #tpu.memory_space<vmem>>, %arg4: memref<128x128xbf16, #tpu.memory_space<vmem>>, %arg5: memref<1x128xf32, #tpu.memory_space<vmem>>, %arg6: memref<16x128xbf16, #tpu.memory_space<vmem>>) attributes {dimension_semantics = [#tpu.dimension_semantics<parallel>], iteration_bounds = array<i64: 1>, scalar_prefetch = 0 : i64, scratch_operands = 0 : i64, tpu.core_type = #tpu.core_type<tc>, window_params = [{transform_indices = @transform_0, window_bounds = array<i64: 16, 16>}, {pipeline_mode = #tpu.pipeline_mode<synchronous>, transform_indices = @transform_1, window_bounds = array<i64: 16, 128>}, {pipeline_mode = #tpu.pipeline_mode<synchronous>, transform_indices = @transform_2, window_bounds = array<i64: 1, 128>}, {pipeline_mode = #tpu.pipeline_mode<synchronous>, transform_indices = @transform_3, window_bounds = array<i64: 128, 128>}, {pipeline_mode = #tpu.pipeline_mode<synchronous>, transform_indices = @transform_4, window_bounds = array<i64: 1, 128>}, {transform_indices = @transform_5, window_bounds = array<i64: 16, 128>}]} {
    %c0 = arith.constant 0 : index
    %c0_0 = arith.constant 0 : index
    %0 = vector.load %arg1[%c0, %c0_0] : memref<16x16xbf16, #tpu.memory_space<vmem>>, vector<16x16xbf16>
    %c0_1 = arith.constant 0 : index
    %c0_2 = arith.constant 0 : index
    %1 = vector.load %arg2[%c0_1, %c0_2] : memref<16x128xbf16, #tpu.memory_space<vmem>>, vector<16x128xbf16>
    %cst = arith.constant dense<0.000000e+00> : vector<16x128xf32>
    %2 = tpu.matmul %0, %1, %cst {dimension_numbers = #tpu.dot_dimension_numbers<[1], [0], [0], [1], [0, 0, 1, 1], [], []>} : vector<16x16xbf16>, vector<16x128xbf16>, vector<16x128xf32> -> vector<16x128xf32>
    %c0_3 = arith.constant 0 : index
    %c0_4 = arith.constant 0 : index
    %3 = vector.load %arg3[%c0_3, %c0_4] : memref<1x128xf32, #tpu.memory_space<vmem>>, vector<1x128xf32>
    %4 = vector.broadcast %3 : vector<1x128xf32> to vector<16x128xf32>
    %5 = arith.addf %2, %4 : vector<16x128xf32>
    %cst_5 = arith.constant 0.000000e+00 : f32
    %6 = vector.broadcast %cst_5 : f32 to vector<16x128xf32>
    %7 = arith.maximumf %5, %6 : vector<16x128xf32>
    %8 = arith.truncf %7 : vector<16x128xf32> to vector<16x128xbf16>
    %c0_6 = arith.constant 0 : index
    %c0_7 = arith.constant 0 : index
    %9 = vector.load %arg4[%c0_6, %c0_7] : memref<128x128xbf16, #tpu.memory_space<vmem>>, vector<128x128xbf16>
    %cst_8 = arith.constant dense<0.000000e+00> : vector<16x128xf32>
    %10 = tpu.matmul %8, %9, %cst_8 {dimension_numbers = #tpu.dot_dimension_numbers<[1], [0], [0], [1], [0, 0, 1, 1], [], []>} : vector<16x128xbf16>, vector<128x128xbf16>, vector<16x128xf32> -> vector<16x128xf32>
    %c0_9 = arith.constant 0 : index
    %c0_10 = arith.constant 0 : index
    %11 = vector.load %arg5[%c0_9, %c0_10] : memref<1x128xf32, #tpu.memory_space<vmem>>, vector<1x128xf32>
    %12 = vector.broadcast %11 : vector<1x128xf32> to vector<16x128xf32>
    %13 = arith.addf %10, %12 : vector<16x128xf32>
    %14 = arith.truncf %13 : vector<16x128xf32> to vector<16x128xbf16>
    %c0_11 = arith.constant 0 : index
    %c0_12 = arith.constant 0 : index
    %15 = vector.load %arg6[%c0_11, %c0_12] : memref<16x128xbf16, #tpu.memory_space<vmem>>, vector<16x128xbf16>
    tpu.vector_store %arg6[%c0_11, %c0_12], %14 {strides = array<i32>} : memref<16x128xbf16, #tpu.memory_space<vmem>>, vector<16x128xbf16>,
    return
  }
  func.func @transform_0(%arg0: i32) -> (i32, i32) {
    %c0_i32 = arith.constant 0 : i32
    %c0_i32_0 = arith.constant 0 : i32
    return %arg0, %c0_i32 : i32, i32
  }
  func.func @transform_1(%arg0: i32) -> (i32, i32) {
    %c0_i32 = arith.constant 0 : i32
    %c0_i32_0 = arith.constant 0 : i32
    %c0_i32_1 = arith.constant 0 : i32
    return %c0_i32, %c0_i32_0 : i32, i32
  }
  func.func @transform_2(%arg0: i32) -> (i32, i32) {
    %c0_i32 = arith.constant 0 : i32
    %c0_i32_0 = arith.constant 0 : i32
    %c0_i32_1 = arith.constant 0 : i32
    return %c0_i32, %c0_i32_0 : i32, i32
  }
  func.func @transform_3(%arg0: i32) -> (i32, i32) {
    %c0_i32 = arith.constant 0 : i32
    %c0_i32_0 = arith.constant 0 : i32
    %c0_i32_1 = arith.constant 0 : i32
    return %c0_i32, %c0_i32_0 : i32, i32
  }
  func.func @transform_4(%arg0: i32) -> (i32, i32) {
    %c0_i32 = arith.constant 0 : i32
    %c0_i32_0 = arith.constant 0 : i32
    %c0_i32_1 = arith.constant 0 : i32
    return %c0_i32, %c0_i32_0 : i32, i32
  }
  func.func @transform_5(%arg0: i32) -> (i32, i32) {
    %c0_i32 = arith.constant 0 : i32
    %c0_i32_0 = arith.constant 0 : i32
    return %arg0, %c0_i32 : i32, i32
  }
}

</mosaic_0001>

<llo_original>
// kernel: linear_qnet_forward.1
$region0: #{linear_qnet_forward.1}
  #allocation0 [shape = 'u32[]', space=smem, size = 0x4, offset = 0x4, fixed_abs, tag = 'smem constant byte address 0x4 - core index']
  #allocation1 [shape = 'u32[144,128]{1,0:T(1,128)}', space=vmem, size = 0x12000, scoped, tag = 'internal scratch']
  %s0 = inlined_call_operand.vmem [shape: bf16[16,16], index: 0, kind: input, shape index: {}]
  %s1 = inlined_call_operand.vmem [shape: bf16[16,128], index: 1, kind: input, shape index: {}]
  %s2 = inlined_call_operand.vmem [shape: f32[1,128], index: 2, kind: input, shape index: {}]
  %s3 = inlined_call_operand.hbm [shape: bf16[128,128], index: 3, kind: input, shape index: {}]
  %s4 = inlined_call_operand.vmem [shape: f32[1,128], index: 4, kind: input, shape index: {}]
  %s5 = inlined_call_operand.vmem [shape: bf16[16,128], index: 5, kind: output, shape index: {}]
  %s6 = sld [smem:[#allocation0]]
  $region34: #{linear_qnet_forward.1} parent=0
    _
  %s8 = ssub.s32 1, %s6
  %s9 = scalar_select 0, %s8, %s6
  $region1: #{linear_qnet_forward.1} parent=0
    #allocation2 [shape = 'u8[32768]{0}', space=vmem, size = 0x8000, scoped, tag = 'input window, operand 3, single buffered']
    #allocation3 [shape = 's32[1]{0}', space=sflag, size = 0x4, scoped, tag = 'scoped memory for linear_qnet_forward.1']
    %10 = vsyncpa [#allocation3], 0
    // Predicated region
    $region2: #{linear_qnet_forward.1} parent=1 // pred_check
      _
    $region3: #{linear_qnet_forward.1} parent=1 // pred_check_branch
      %12 = sbr.rel (0) target = $region5
    $region4: #{linear_qnet_forward.1} parent=1 // pred_region
      _
    $region5: #{linear_qnet_forward.1} parent=1 // pred_fallthru
      _
    // Predicated region
    $region6: #{linear_qnet_forward.1} parent=1 // pred_check
      _
    $region7: #{linear_qnet_forward.1} parent=1 // pred_check_branch
      %14 = sbr.rel (0) target = $region9
    $region8: #{linear_qnet_forward.1} parent=1 // pred_region
      _
    $region9: #{linear_qnet_forward.1} parent=1 // pred_fallthru
      _
    // Predicated region
    $region10: #{linear_qnet_forward.1} parent=1 // pred_check
      _
    $region11: #{linear_qnet_forward.1} parent=1 // pred_check_branch
      %16 = sbr.rel (0) target = $region13
    $region12: #{linear_qnet_forward.1} parent=1 // pred_region
      _
    $region13: #{linear_qnet_forward.1} parent=1 // pred_fallthru
      _
    // Predicated region
    $region14: #{linear_qnet_forward.1} parent=1 // pred_check
      _
    $region15: #{linear_qnet_forward.1} parent=1 // pred_check_branch
      %18 = sbr.rel (0) target = $region17
    $region16: #{linear_qnet_forward.1} parent=1 // pred_region
      %s20 = ssub.s32 1024, 1024
      %21 = vsyncadd [#allocation3], %s20
      %s22 = sshll.u32 [#allocation2], 4
      %s23 = int_to_ptr.vmem [resolvable:$true] %s22
      %28 = dma.hbm_to_vmem [thread:$0]  %s3, 1024, %s23, [#allocation3], 64, 64, 4
    $region17: #{linear_qnet_forward.1} parent=1 // pred_fallthru
      _
    // Predicated region
    $region18: #{linear_qnet_forward.1} parent=1 // pred_check
      _
    $region19: #{linear_qnet_forward.1} parent=1 // pred_check_branch
      %30 = sbr.rel (0) target = $region21
    $region20: #{linear_qnet_forward.1} parent=1 // pred_region
      _
    $region21: #{linear_qnet_forward.1} parent=1 // pred_fallthru
      _
    // Predicated region
    $region22: #{linear_qnet_forward.1} parent=1 // pred_check
      _
    $region23: #{linear_qnet_forward.1} parent=1 // pred_check_branch
      %32 = sbr.rel (0) target = $region25
    $region24: #{linear_qnet_forward.1} parent=1 // pred_region
      %33 = dma.done [#allocation3], 1024
    $region25: #{linear_qnet_forward.1} parent=1 // pred_fallthru
      _
    %v35 = vld [vmem:[%s0] sm:$0xf]
    %v36 = vld [vmem:[%s0 + $0x4] sm:$0xf]
    %v37 = vld [vmem:[%s1] sm:$0xf]
    %v38 = vld [vmem:[%s1 + $0x4] sm:$0xf]
    %v39 = vld [vmem:[%s2] sm:$0x1]
    %v41 = vlaneseq
    %v42 = vshrl.u32 %v41, 7
    %v43 = vsub.s32 0, %v42
    %v44 = vrot.slane %v39, %v43
    %v48 = vunpack.c.l.b16 %v35
    %v49 = vunpack.c.l.b16 %v36
    %v50 = vpack.c.b16 %v49, %v48
    %v53 = vunpack.c.l.b16 %v37
    %v54 = vunpack.c.l.b16 %v38
    %v55 = vpack.c.b16 %v54, %v53
    %vm57 = vcmask 130048
    %v59 = vsel %vm57, %v50, 0
    %61 = vmatprep.subr.bf16.mxu0 0
    %62 = vmatpush1.bf16.msra.mxu0 %v55
    %63 = vmatprep.subr.bf16.mxu0 0
    %64 = vmatpush1.bf16.msra.mxu0 0
    %65 = vmatprep.subr.bf16.mxu0 0
    %66 = vmatpush1.bf16.msra.mxu0 0
    %67 = vmatprep.subr.bf16.mxu0 0
    %68 = vmatpush1.bf16.msra.mxu0 0
    %69 = vmatprep.subr.bf16.mxu0 0
    %70 = vmatpush1.bf16.msra.mxu0 0
    %71 = vmatprep.subr.bf16.mxu0 0
    %72 = vmatpush1.bf16.msra.mxu0 0
    %73 = vmatprep.subr.bf16.mxu0 0
    %74 = vmatpush1.bf16.msra.mxu0 0
    %75 = vmatprep.subr.bf16.mxu0 0
    %76 = vmatpush1.bf16.msra.mxu0 0
    %77 = vmatprep.subr.bf16.mxu0 0
    %78 = vmatpush1.bf16.msra.mxu0 0
    %79 = vmatprep.subr.bf16.mxu0 0
    %80 = vmatpush1.bf16.msra.mxu0 0
    %81 = vmatprep.subr.bf16.mxu0 0
    %82 = vmatpush1.bf16.msra.mxu0 0
    %83 = vmatprep.subr.bf16.mxu0 0
    %84 = vmatpush1.bf16.msra.mxu0 0
    %85 = vmatprep.subr.bf16.mxu0 0
    %86 = vmatpush1.bf16.msra.mxu0 0
    %87 = vmatprep.subr.bf16.mxu0 0
    %88 = vmatpush1.bf16.msra.mxu0 0
    %89 = vmatprep.subr.bf16.mxu0 0
    %90 = vmatpush1.bf16.msra.mxu0 0
    %91 = vmatprep.subr.bf16.mxu0 0
    %92 = vmatpush1.bf16.msra.mxu0 0
    %93 = vmatprep.mubr.bf16.mxu0 0
    %94 = vmatmul.mubr.bf16.gmra.mrb[0].mxu0 %v59
    %v95 = vpop.f32.mrb[0].mxu0
    %v96 = vadd.f32 %v44, %v95
    %v97 = vpop.f32.mrb[0].mxu0
    %v98 = vpop.f32.mrb[0].mxu0
    %v99 = vadd.f32 %v44, %v98
    %v100 = vpop.f32.mrb[0].mxu0
    %101 = vdwg.mxu0
    %v102 = vmax.f32 %v96, 0.0
    %v103 = vmax.f32 %v99, 0.0
    %v104 = vpack.c.bf16 %v103, %v102
    %v105 = vld [vmem:[#allocation2] sm:$0xf]
    %v106 = vld [vmem:[#allocation2 + $0x4] sm:$0xf]
    %v107 = vld [vmem:[#allocation2 + $0x8] sm:$0xf]
    %v108 = vld [vmem:[#allocation2 + $0xc] sm:$0xf]
    %v109 = vld [vmem:[#allocation2 + $0x10] sm:$0xf]
    %v110 = vld [vmem:[#allocation2 + $0x14] sm:$0xf]
    %v111 = vld [vmem:[#allocation2 + $0x18] sm:$0xf]
    %v112 = vld [vmem:[#allocation2 + $0x1c] sm:$0xf]
    %v113 = vld [vmem:[#allocation2 + $0x20] sm:$0xf]
    %v114 = vld [vmem:[#allocation2 + $0x24] sm:$0xf]
    %v115 = vld [vmem:[#allocation2 + $0x28] sm:$0xf]
    %v116 = vld [vmem:[#allocation2 + $0x2c] sm:$0xf]
    %v117 = vld [vmem:[#allocation2 + $0x30] sm:$0xf]
    %v118 = vld [vmem:[#allocation2 + $0x34] sm:$0xf]
    %v119 = vld [vmem:[#allocation2 + $0x38] sm:$0xf]
    %v120 = vld [vmem:[#allocation2 + $0x3c] sm:$0xf]
    %v121 = vld [vmem:[%s4] sm:$0x1]
    %v123 = vlaneseq
    %v124 = vshrl.u32 %v123, 7
    %v125 = vsub.s32 0, %v124
    %v126 = vrot.slane %v121, %v125
    %v144 = vunpack.c.l.b16 %v105
    %v145 = vunpack.c.l.b16 %v106
    %v146 = vunpack.c.l.b16 %v107
    %v147 = vunpack.c.l.b16 %v108
    %v148 = vunpack.c.l.b16 %v109
    %v149 = vunpack.c.l.b16 %v110
    %v150 = vunpack.c.l.b16 %v111
    %v151 = vunpack.c.l.b16 %v112
    %v152 = vunpack.c.l.b16 %v113
    %v153 = vunpack.c.l.b16 %v114
    %v154 = vunpack.c.l.b16 %v115
    %v155 = vunpack.c.l.b16 %v116
    %v156 = vunpack.c.l.b16 %v117
    %v157 = vunpack.c.l.b16 %v118
    %v158 = vunpack.c.l.b16 %v119
    %v159 = vunpack.c.l.b16 %v120
    %v160 = vpack.c.b16 %v145, %v144
    %v161 = vpack.c.b16 %v147, %v146
    %v162 = vpack.c.b16 %v149, %v148
    %v163 = vpack.c.b16 %v151, %v150
    %v164 = vpack.c.b16 %v153, %v152
    %v165 = vpack.c.b16 %v155, %v154
    %v166 = vpack.c.b16 %v157, %v156
    %v167 = vpack.c.b16 %v159, %v158
    %176 = vmatprep.subr.bf16.mxu0 0
    %177 = vmatpush1.bf16.msra.mxu0 %v160
    %178 = vmatprep.subr.bf16.mxu0 0
    %179 = vmatpush1.bf16.msra.mxu0 %v161
    %180 = vmatprep.subr.bf16.mxu0 0
    %181 = vmatpush1.bf16.msra.mxu0 %v162
    %182 = vmatprep.subr.bf16.mxu0 0
    %183 = vmatpush1.bf16.msra.mxu0 %v163
    %184 = vmatprep.subr.bf16.mxu0 0
    %185 = vmatpush1.bf16.msra.mxu0 %v164
    %186 = vmatprep.subr.bf16.mxu0 0
    %187 = vmatpush1.bf16.msra.mxu0 %v165
    %188 = vmatprep.subr.bf16.mxu0 0
    %189 = vmatpush1.bf16.msra.mxu0 %v166
    %190 = vmatprep.subr.bf16.mxu0 0
    %191 = vmatpush1.bf16.msra.mxu0 %v167
    %192 = vmatprep.subr.bf16.mxu0 0
    %193 = vmatpush1.bf16.msra.mxu0 0
    %194 = vmatprep.subr.bf16.mxu0 0
    %195 = vmatpush1.bf16.msra.mxu0 0
    %196 = vmatprep.subr.bf16.mxu0 0
    %197 = vmatpush1.bf16.msra.mxu0 0
    %198 = vmatprep.subr.bf16.mxu0 0
    %199 = vmatpush1.bf16.msra.mxu0 0
    %200 = vmatprep.subr.bf16.mxu0 0
    %201 = vmatpush1.bf16.msra.mxu0 0
    %202 = vmatprep.subr.bf16.mxu0 0
    %203 = vmatpush1.bf16.msra.mxu0 0
    %204 = vmatprep.subr.bf16.mxu0 0
    %205 = vmatpush1.bf16.msra.mxu0 0
    %206 = vmatprep.subr.bf16.mxu0 0
    %207 = vmatpush1.bf16.msra.mxu0 0
    %208 = vmatprep.mubr.bf16.mxu0 0
    %209 = vmatmul.mubr.bf16.gmra.mrb[0].mxu0 %v104
    %v210 = vpop.f32.mrb[0].mxu0
    %v211 = vadd.f32 %v126, %v210
    %v212 = vpop.f32.mrb[0].mxu0
    %v213 = vpop.f32.mrb[0].mxu0
    %v214 = vadd.f32 %v126, %v213
    %v215 = vpop.f32.mrb[0].mxu0
    %216 = vdwg.mxu0
    %v217 = vpack.c.bf16 %v214, %v211
    %v219 = vunpack.c.l.b16 %v217
    %v220 = vunpack.c.h.b16 %v217
    %v221 = vpack.c.b16 %v219, %v219
    %v222 = vpack.c.b16 %v220, %v220
    %225 = vst [vmem:[%s5] sm:$0xf] %v221
    %226 = vst [vmem:[%s5 + $0x4] sm:$0xf] %v222
    // Predicated region
    $region26: #{linear_qnet_forward.1} parent=1 // pred_check
      _
    $region27: #{linear_qnet_forward.1} parent=1 // pred_check_branch
      %228 = sbr.rel (0) target = $region29
    $region28: #{linear_qnet_forward.1} parent=1 // pred_region
      _
    $region29: #{linear_qnet_forward.1} parent=1 // pred_fallthru
      _
    // Predicated region
    $region30: #{linear_qnet_forward.1} parent=1 // pred_check
      _
    $region31: #{linear_qnet_forward.1} parent=1 // pred_check_branch
      %230 = sbr.rel (0) target = $region33
    $region32: #{linear_qnet_forward.1} parent=1 // pred_region
      _
    $region33: #{linear_qnet_forward.1} parent=1 // pred_fallthru
      _
    %231 = vsyncpa [#allocation3], 1

</llo_original>
